<compile_context>
chip_gen: v7x
topology: tpu7x:2x2x1
jax: 0.10.0
libtpu: 0.0.40
codegen_flags: <defaults>
</compile_context>

<pallas_src>
import functools

import jax
import jax.numpy as jnp
from jax.experimental import pallas as pl
from jax.experimental.pallas import tpu as pltpu


def _round_up(x, m):
    return ((x + m - 1) // m) * m


# ---------------------------------------------------------------------------
# Path 1: 1x1 linear layer -> pure VPU elementwise kernel (the demo shape).
# ---------------------------------------------------------------------------
def _scalar_linear_kernel(x_ref, w_ref, b_ref, o_ref):
    # x_ref: (rows, 128) lane-dense f32 tile in VMEM.
    # w_ref, b_ref: (1, 1) f32 scalars in SMEM -> broadcast on the VPU.
    o_ref[...] = x_ref[...] * w_ref[0, 0] + b_ref[0, 0]


def _scalar_linear(x, weight, bias):
    n = x.shape[0]
    lanes, sublanes = 128, 8
    n_pad = _round_up(n, lanes * sublanes)  # fully (8,128)-aligned slab

    xf = jnp.zeros((n_pad,), x.dtype).at[:n].set(x[:, 0])
    x2d = xf.reshape(n_pad // lanes, lanes)  # lane-dense layout
    w2d = weight.reshape(1, 1)
    b2d = bias.reshape(1, 1)

    out = pl.pallas_call(
        _scalar_linear_kernel,
        out_shape=jax.ShapeDtypeStruct(x2d.shape, x.dtype),
        grid_spec=pltpu.PrefetchScalarGridSpec(
            num_scalar_prefetch=0,
            grid=(1,),
            in_specs=[
                pl.BlockSpec(x2d.shape, lambda i: (0, 0)),
                pl.BlockSpec(memory_space=pltpu.MemorySpace.SMEM),
                pl.BlockSpec(memory_space=pltpu.MemorySpace.SMEM),
            ],
            out_specs=pl.BlockSpec(x2d.shape, lambda i: (0, 0)),
        ),
        compiler_params=pltpu.CompilerParams(
            dimension_semantics=("arbitrary",),
        ),
    )(x2d, w2d, b2d)
    return out.reshape(-1)[:n].reshape(n, 1)


# ---------------------------------------------------------------------------
# Path 2: general tiled MXU matmul + bias epilogue.
# ---------------------------------------------------------------------------
def _tiled_linear_kernel(x_ref, w_ref, b_ref, o_ref, acc_ref):
    k = pl.program_id(2)

    @pl.when(k == 0)
    def _():
        acc_ref[...] = jnp.zeros_like(acc_ref)

    # Weight was pre-transposed to (in, out) in the wrapper: no in-kernel .T.
    acc_ref[...] += jnp.dot(
        x_ref[...], w_ref[...], preferred_element_type=jnp.float32
    )

    @pl.when(k == pl.num_programs(2) - 1)
    def _():
        # Bias applied once per output tile, in the epilogue only.
        o_ref[...] = (acc_ref[...] + b_ref[...]).astype(o_ref.dtype)


def _tiled_linear(x, weight, bias, *, tm=256, tn=256, tk=256):
    m, k = x.shape
    out_f = weight.shape[0]

    # One-time host/XLA-side transpose to the MXU-friendly (in, out) layout.
    w_t = weight.T

    # Cap tiles at the (aligned) problem size; tn/tk stay multiples of 128,
    # tm a multiple of 8 -> all blocks satisfy the (8, 128) constraint.
    tm = min(tm, _round_up(m, 8))
    tk = min(tk, _round_up(k, 128))
    tn = min(tn, _round_up(out_f, 128))

    m_pad = _round_up(m, tm)
    k_pad = _round_up(k, tk)
    n_pad = _round_up(out_f, tn)

    x_p = jnp.zeros((m_pad, k_pad), x.dtype).at[:m, :k].set(x)
    w_p = jnp.zeros((k_pad, n_pad), w_t.dtype).at[:k, :out_f].set(w_t)
    b_p = jnp.zeros((1, n_pad), bias.dtype).at[0, :out_f].set(bias)

    grid = (m_pad // tm, n_pad // tn, k_pad // tk)

    out = pl.pallas_call(
        _tiled_linear_kernel,
        out_shape=jax.ShapeDtypeStruct((m_pad, n_pad), x.dtype),
        grid_spec=pltpu.PrefetchScalarGridSpec(
            num_scalar_prefetch=0,
            grid=grid,
            in_specs=[
                pl.BlockSpec((tm, tk), lambda i, j, kk: (i, kk)),
                pl.BlockSpec((tk, tn), lambda i, j, kk: (kk, j)),
                pl.BlockSpec((1, tn), lambda i, j, kk: (0, j)),
            ],
            out_specs=pl.BlockSpec((tm, tn), lambda i, j, kk: (i, j)),
            scratch_shapes=[pltpu.VMEM((tm, tn), jnp.float32)],
        ),
        compiler_params=pltpu.CompilerParams(
            dimension_semantics=("parallel", "parallel", "arbitrary"),
            vmem_limit_bytes=32 * 1024 * 1024,
        ),
    )(x_p, w_p, b_p)
    return out[:m, :out_f]


# ---------------------------------------------------------------------------
# Public forward (dispatch).
# ---------------------------------------------------------------------------
@functools.partial(jax.jit, static_argnames=("tm", "tn", "tk"))
def linear_forward(x, weight, bias, *, tm=256, tn=256, tk=256):
    """Pallas linear layer: y = x @ weight.T + bias.

    x: (N, in_features), weight: (out_features, in_features) [PyTorch layout],
    bias: (out_features,).
    """
    out_f, in_f = weight.shape
    if in_f == 1 and out_f == 1:
        return _scalar_linear(x, weight, bias)
    return _tiled_linear(x, weight, bias, tm=tm, tn=tn, tk=tk)


if __name__ == "__main__":
    # Module spec: LR(input_size=1, output_size=1); input x = randn(100, 1) * 10
    input_size, output_size, n = 1, 1, 100

    key = jax.random.PRNGKey(0)
    kx, kw, kb, kx2, kw2, kb2 = jax.random.split(key, 6)

    # PyTorch-style uniform(-1/sqrt(in), 1/sqrt(in)) init.
    bound = 1.0 / (input_size ** 0.5)
    weight = jax.random.uniform(
        kw, (output_size, input_size), jnp.float32, minval=-bound, maxval=bound
    )
    bias = jax.random.uniform(
        kb, (output_size,), jnp.float32, minval=-bound, maxval=bound
    )
    x = jax.random.normal(kx, (n, input_size), jnp.float32) * 10.0

    # --- Demo shape (scalar VPU path) -------------------------------------
    y = linear_forward(x, weight, bias)
    jax.block_until_ready(y)
    y_ref = x @ weight.T + bias[None, :]
    assert y.shape == (n, output_size)
    assert jnp.allclose(y, y_ref, atol=1e-5, rtol=1e-5)

    # --- Larger linear layer (tiled MXU path, exercises padding + K-tiling)
    n2, in2, out2 = 300, 384, 200
    w2 = jax.random.uniform(kw2, (out2, in2), jnp.float32, minval=-0.05, maxval=0.05)
    b2 = jax.random.uniform(kb2, (out2,), jnp.float32, minval=-0.05, maxval=0.05)
    x2 = jax.random.normal(kx2, (n2, in2), jnp.float32)

    y2 = linear_forward(x2, w2, b2)
    jax.block_until_ready(y2)
    y2_ref = x2 @ w2.T + b2[None, :]
    assert y2.shape == (n2, out2)
    assert jnp.allclose(y2, y2_ref, atol=1e-2, rtol=1e-2)

    print("KERNEL_OK")
</pallas_src>

<mosaic_0001>
module attributes {stable_mosaic.version = 11 : i64} {
  func.func @_scalar_linear_kernel(%arg0: i32, %arg1: memref<8x128xf32, #tpu.memory_space<vmem>>, %arg2: memref<1x1xf32, #tpu.memory_space<smem>>, %arg3: memref<1x1xf32, #tpu.memory_space<smem>>, %arg4: memref<8x128xf32, #tpu.memory_space<vmem>>) attributes {dimension_semantics = [#tpu.dimension_semantics<arbitrary>], iteration_bounds = array<i64: 1>, scalar_prefetch = 0 : i64, scratch_operands = 0 : i64, tpu.core_type = #tpu.core_type<tc>, window_params = [{pipeline_mode = #tpu.pipeline_mode<synchronous>, transform_indices = @transform_0, window_bounds = array<i64: 8, 128>}, {transform_indices = @transform_1, window_bounds = array<i64: 1, 1>}, {transform_indices = @transform_2, window_bounds = array<i64: 1, 1>}, {pipeline_mode = #tpu.pipeline_mode<synchronous>, transform_indices = @transform_3, window_bounds = array<i64: 8, 128>}]} {
    %c0 = arith.constant 0 : index
    %c0_0 = arith.constant 0 : index
    %0 = vector.load %arg1[%c0, %c0_0] : memref<8x128xf32, #tpu.memory_space<vmem>>, vector<8x128xf32>
    %c0_1 = arith.constant 0 : index
    %c0_2 = arith.constant 0 : index
    %1 = memref.load %arg2[%c0_1, %c0_2] : memref<1x1xf32, #tpu.memory_space<smem>>
    %2 = vector.broadcast %1 : f32 to vector<8x128xf32>
    %3 = arith.mulf %0, %2 : vector<8x128xf32>
    %c0_3 = arith.constant 0 : index
    %c0_4 = arith.constant 0 : index
    %4 = memref.load %arg3[%c0_3, %c0_4] : memref<1x1xf32, #tpu.memory_space<smem>>
    %5 = vector.broadcast %4 : f32 to vector<8x128xf32>
    %6 = arith.addf %3, %5 : vector<8x128xf32>
    %c0_5 = arith.constant 0 : index
    %c0_6 = arith.constant 0 : index
    %7 = vector.load %arg4[%c0_5, %c0_6] : memref<8x128xf32, #tpu.memory_space<vmem>>, vector<8x128xf32>
    tpu.vector_store %arg4[%c0_5, %c0_6], %6 {strides = array<i32>} : memref<8x128xf32, #tpu.memory_space<vmem>>, vector<8x128xf32>,
    return
  }
  func.func @transform_0(%arg0: i32) -> (i32, i32) {
    %c0_i32 = arith.constant 0 : i32
    %c0_i32_0 = arith.constant 0 : i32
    %c0_i32_1 = arith.constant 0 : i32
    return %c0_i32, %c0_i32_0 : i32, i32
  }
  func.func @transform_1(%arg0: i32) -> (i32, i32) {
    %c0_i32 = arith.constant 0 : i32
    %c0_i32_0 = arith.constant 0 : i32
    %c0_i32_1 = arith.constant 0 : i32
    return %c0_i32, %c0_i32_0 : i32, i32
  }
  func.func @transform_2(%arg0: i32) -> (i32, i32) {
    %c0_i32 = arith.constant 0 : i32
    %c0_i32_0 = arith.constant 0 : i32
    %c0_i32_1 = arith.constant 0 : i32
    return %c0_i32, %c0_i32_0 : i32, i32
  }
  func.func @transform_3(%arg0: i32) -> (i32, i32) {
    %c0_i32 = arith.constant 0 : i32
    %c0_i32_0 = arith.constant 0 : i32
    %c0_i32_1 = arith.constant 0 : i32
    return %c0_i32, %c0_i32_0 : i32, i32
  }
}

</mosaic_0001>

<llo_original>
// kernel: linear_forward.1
$region0: #{linear_forward.1}
  #allocation0 [shape = 'u32[]', space=smem, size = 0x4, offset = 0x4, fixed_abs, tag = 'smem constant byte address 0x4 - core index']
  #allocation1 [shape = 'u32[144,128]{1,0:T(1,128)}', space=vmem, size = 0x12000, scoped, tag = 'internal scratch']
  #allocation2 [shape = 'f32[1,1]{1,0:T(1,128)S(6)}', space=smem, size = 0x200, scoped, tag = 'scoped memory for linear_forward.1']
  #allocation3 [shape = 'f32[1,1]{1,0:T(1,128)S(6)}', space=smem, size = 0x200, scoped, tag = 'scoped memory for linear_forward.1']
  %s0 = inlined_call_operand.vmem [shape: f32[8,128], index: 0, kind: input, shape index: {}]
  %s1 = inlined_call_operand.<no memory space> [shape: f32[1,1], index: 1, kind: input, shape index: {}]
  %s2 = inlined_call_operand.<no memory space> [shape: f32[1,1], index: 2, kind: input, shape index: {}]
  %s3 = inlined_call_operand.vmem [shape: f32[8,128], index: 3, kind: output, shape index: {}]
  %s4 = sld [smem:[#allocation0]]
  $region22: #{linear_forward.1} parent=0
    _
  %s6 = ssub.s32 1, %s4
  %s7 = scalar_select 0, %s6, %s4
  %8 = sst [smem:[#allocation2]] %s1
  %9 = sst [smem:[#allocation3]] %s2
  // Predicated region
  $region2: #{linear_forward.1} parent=0 // pred_check
    _
  $region3: #{linear_forward.1} parent=0 // pred_check_branch
    %11 = sbr.rel (0) target = $region5
  $region4: #{linear_forward.1} parent=0 // pred_region
    _
  $region5: #{linear_forward.1} parent=0 // pred_fallthru
    _
  // Predicated region
  $region6: #{linear_forward.1} parent=0 // pred_check
    _
  $region7: #{linear_forward.1} parent=0 // pred_check_branch
    %13 = sbr.rel (0) target = $region9
  $region8: #{linear_forward.1} parent=0 // pred_region
    _
  $region9: #{linear_forward.1} parent=0 // pred_fallthru
    _
  // Predicated region
  $region10: #{linear_forward.1} parent=0 // pred_check
    _
  $region11: #{linear_forward.1} parent=0 // pred_check_branch
    %15 = sbr.rel (0) target = $region13
  $region12: #{linear_forward.1} parent=0 // pred_region
    _
  $region13: #{linear_forward.1} parent=0 // pred_fallthru
    _
  %v16 = vld [vmem:[%s0] sm:$0xff]
  %s17 = sld [smem:[#allocation2]]
  %v18 = vstv %s17
  %v19 = vmul.f32 %v16, %v18
  %s20 = sld [smem:[#allocation3]]
  %v21 = vstv %s20
  %v22 = vadd.f32 %v19, %v21
  %23 = vst [vmem:[%s3] sm:$0xff] %v22
  // Predicated region
  $region14: #{linear_forward.1} parent=0 // pred_check
    _
  $region15: #{linear_forward.1} parent=0 // pred_check_branch
    %25 = sbr.rel (0) target = $region17
  $region16: #{linear_forward.1} parent=0 // pred_region
    _
  $region17: #{linear_forward.1} parent=0 // pred_fallthru
    _
  // Predicated region
  $region18: #{linear_forward.1} parent=0 // pred_check
    _
  $region19: #{linear_forward.1} parent=0 // pred_check_branch
    %27 = sbr.rel (0) target = $region21
  $region20: #{linear_forward.1} parent=0 // pred_region
    _
  $region21: #{linear_forward.1} parent=0 // pred_fallthru
    _

</llo_original>
